<compile_context>
chip_gen: v7x
topology: tpu7x:2x2x1
jax: 0.10.0
libtpu: 0.0.40
codegen_flags: <defaults>
</compile_context>

<pallas_src>
import functools

import jax
import jax.numpy as jnp
from jax.experimental import pallas as pl
from jax.experimental.pallas import tpu as pltpu

_LANE = 128          # TPU lane width: num_class is padded to this for lane-dense W/b/out
_MAX_TB = 2048       # max batch-tile rows (big DMAs, still small VMEM footprint)
_MIN_TB = 256        # min batch-tile rows once we start splitting the batch


def _round_up(x, m):
    return ((x + m - 1) // m) * m


def _cdiv(a, b):
    return (a + b - 1) // b


def _pick_batch_tile(B):
    """Pick the batch tile TB.

    * B <= 256: one full-extent tile (block == full array dim is always legal, even when
      B is not a multiple of 8), so tiny/demo batches need no padding at all.
    * Larger B: aim for >= 4 tiles so the "parallel" B axis can shard across v7x's two
      TensorCores, tile a multiple of 16 (clean bf16 sublane packing), clamped to
      [256, 2048] rows. The last tile may be ragged; Pallas masks the boundary.
    """
    if B <= _MIN_TB:
        return B
    tb = _round_up(_cdiv(B, 4), 16)
    return max(_MIN_TB, min(_MAX_TB, tb))


def _fc_kernel(x_ref, w_ref, b_ref, o_ref):
    # Cast X f32 -> bf16 *inside* the kernel (no separate wrapper cast pass over HBM),
    # MXU matmul with f32 accumulation, bias add stays in f32 on the accumulator.
    x = x_ref[...].astype(jnp.bfloat16)
    acc = jnp.dot(x, w_ref[...], preferred_element_type=jnp.float32)
    o_ref[...] = (acc + b_ref[...]).astype(o_ref.dtype)


def pack_fc_params(fc_weight, fc_bias):
    """One-time packing of PyTorch nn.Linear params into the kernel layout.

    fc_weight : (num_class, 512) -> (512, N_pad) bf16, zero-padded lane-dense columns
    fc_bias   : (num_class,)     -> (1, N_pad)  f32,  zero-padded
    Hoisted out of the per-call forward so the transpose/pad/cast ops are off the hot path.
    Padded columns are exactly zero (weights AND bias), so padded logits are 0 and get
    sliced off in net_forward.
    """
    N, K = fc_weight.shape
    N_pad = _round_up(max(N, 1), _LANE)
    w_pad = jnp.zeros((K, N_pad), dtype=jnp.bfloat16)
    w_pad = w_pad.at[:, :N].set(fc_weight.T.astype(jnp.bfloat16))
    b_pad = jnp.zeros((1, N_pad), dtype=jnp.float32)
    b_pad = b_pad.at[:, :N].set(fc_bias.astype(jnp.float32))
    return w_pad, b_pad


@functools.partial(jax.jit, static_argnames=("num_class",))
def net_forward(feat_nchw, w_packed, b_packed, num_class):
    """Pallas implementation of Net.forward given the backbone feature map.

    feat_nchw : (B, 512, 1, 1) backbone output (NCHW, like PyTorch), f32 or bf16
    w_packed  : (512, N_pad)   bf16, from pack_fc_params
    b_packed  : (1, N_pad)     f32,  from pack_fc_params
    returns   : (B, num_class) logits (float32)
    """
    B = feat_nchw.shape[0]
    K = feat_nchw.shape[1] * feat_nchw.shape[2] * feat_nchw.shape[3]
    N_pad = w_packed.shape[1]
    assert w_packed.shape[0] == K

    # torch.flatten(x, start_dim=1): (B, 512, 1, 1) -> (B, 512). Metadata-only reshape.
    x2d = feat_nchw.reshape(B, K)

    TB = _pick_batch_tile(B)
    grid = (_cdiv(B, TB),)  # ragged last tile OK: OOB reads padded, OOB writes masked

    cost = pl.CostEstimate(
        flops=2 * B * K * N_pad,
        transcendentals=0,
        bytes_accessed=(B * K * x2d.dtype.itemsize   # X read (f32 or bf16, as produced)
                        + K * N_pad * 2               # W read (bf16)
                        + N_pad * 4                   # bias read (f32)
                        + B * N_pad * 4),             # logits write (f32)
    )

    out = pl.pallas_call(
        _fc_kernel,
        out_shape=jax.ShapeDtypeStruct((B, N_pad), jnp.float32),
        grid_spec=pltpu.PrefetchScalarGridSpec(
            num_scalar_prefetch=0,
            grid=grid,
            in_specs=[
                pl.BlockSpec((TB, K), lambda i: (i, 0)),      # X tile marches over B
                pl.BlockSpec((K, N_pad), lambda i: (0, 0)),   # W stays VMEM-resident
                pl.BlockSpec((1, N_pad), lambda i: (0, 0)),   # bias stays VMEM-resident
            ],
            out_specs=pl.BlockSpec((TB, N_pad), lambda i: (i, 0)),
        ),
        compiler_params=pltpu.CompilerParams(
            dimension_semantics=("parallel",),   # independent B tiles (megacore on v7x)
            vmem_limit_bytes=32 * 1024 * 1024,   # headroom for TB=2048 double-buffering
        ),
        cost_estimate=cost,
    )(x2d, w_packed, b_packed)

    # Strip lane padding -> (B, num_class), matching PyTorch's `out`.
    return out[:, :num_class]


def init_fc_params(key, num_class, in_features=512):
    """Deterministic init mimicking PyTorch nn.Linear default (uniform +/- 1/sqrt(K))."""
    kw, kb = jax.random.split(key)
    bound = 1.0 / jnp.sqrt(jnp.float32(in_features))
    weight = jax.random.uniform(kw, (num_class, in_features), jnp.float32,
                                minval=-bound, maxval=bound)
    bias = jax.random.uniform(kb, (num_class,), jnp.float32,
                              minval=-bound, maxval=bound)
    return weight, bias


if __name__ == "__main__":
    key = jax.random.PRNGKey(0)
    k_feat, k_params = jax.random.split(key)

    B = 4
    num_class = 10
    # Backbone (Model().f) output feature map: (B, 512, 1, 1), NCHW like PyTorch.
    feat = jax.random.normal(k_feat, (B, 512, 1, 1), dtype=jnp.float32)
    fc_w, fc_b = init_fc_params(k_params, num_class, in_features=512)

    # One-time parameter packing (off the per-forward hot path).
    w_packed, b_packed = pack_fc_params(fc_w, fc_b)
    w_packed, b_packed = jax.block_until_ready((w_packed, b_packed))

    logits = net_forward(feat, w_packed, b_packed, num_class=num_class)
    logits = jax.block_until_ready(logits)
    assert logits.shape == (B, num_class)

    # Reference: same math (bf16 MXU inputs, f32 accumulation, f32 bias add) in plain JAX.
    x_ref = feat.reshape(B, -1).astype(jnp.bfloat16)
    w_ref = fc_w.T.astype(jnp.bfloat16)
    ref = jnp.dot(x_ref, w_ref, preferred_element_type=jnp.float32) + fc_b
    assert jnp.allclose(logits, ref, atol=1e-3, rtol=1e-3)

    # Looser sanity check against full-f32 math (bf16 rounding of inputs/weights only).
    ref_f32 = feat.reshape(B, -1) @ fc_w.T + fc_b
    assert jnp.allclose(logits, ref_f32, atol=3e-2, rtol=3e-2)

    print("KERNEL_OK")
</pallas_src>

<mosaic_0001>
module attributes {stable_mosaic.version = 11 : i64} {
  func.func @_fc_kernel(%arg0: i32, %arg1: memref<4x512xf32, #tpu.memory_space<vmem>>, %arg2: memref<512x128xbf16, #tpu.memory_space<vmem>>, %arg3: memref<1x128xf32, #tpu.memory_space<vmem>>, %arg4: memref<4x128xf32, #tpu.memory_space<vmem>>) attributes {dimension_semantics = [#tpu.dimension_semantics<parallel>], iteration_bounds = array<i64: 1>, scalar_prefetch = 0 : i64, scratch_operands = 0 : i64, tpu.core_type = #tpu.core_type<tc>, window_params = [{transform_indices = @transform_0, window_bounds = array<i64: 4, 512>}, {pipeline_mode = #tpu.pipeline_mode<synchronous>, transform_indices = @transform_1, window_bounds = array<i64: 512, 128>}, {pipeline_mode = #tpu.pipeline_mode<synchronous>, transform_indices = @transform_2, window_bounds = array<i64: 1, 128>}, {transform_indices = @transform_3, window_bounds = array<i64: 4, 128>}]} {
    %c0 = arith.constant 0 : index
    %c0_0 = arith.constant 0 : index
    %0 = vector.load %arg1[%c0, %c0_0] : memref<4x512xf32, #tpu.memory_space<vmem>>, vector<4x512xf32>
    %1 = arith.truncf %0 : vector<4x512xf32> to vector<4x512xbf16>
    %c0_1 = arith.constant 0 : index
    %c0_2 = arith.constant 0 : index
    %2 = vector.load %arg2[%c0_1, %c0_2] : memref<512x128xbf16, #tpu.memory_space<vmem>>, vector<512x128xbf16>
    %cst = arith.constant dense<0.000000e+00> : vector<4x128xf32>
    %3 = tpu.matmul %1, %2, %cst {dimension_numbers = #tpu.dot_dimension_numbers<[1], [0], [0], [1], [0, 0, 1, 1], [], []>} : vector<4x512xbf16>, vector<512x128xbf16>, vector<4x128xf32> -> vector<4x128xf32>
    %c0_3 = arith.constant 0 : index
    %c0_4 = arith.constant 0 : index
    %4 = vector.load %arg3[%c0_3, %c0_4] : memref<1x128xf32, #tpu.memory_space<vmem>>, vector<1x128xf32>
    %5 = vector.broadcast %4 : vector<1x128xf32> to vector<4x128xf32>
    %6 = arith.addf %3, %5 : vector<4x128xf32>
    %c0_5 = arith.constant 0 : index
    %c0_6 = arith.constant 0 : index
    %7 = vector.load %arg4[%c0_5, %c0_6] : memref<4x128xf32, #tpu.memory_space<vmem>>, vector<4x128xf32>
    tpu.vector_store %arg4[%c0_5, %c0_6], %6 {strides = array<i32>} : memref<4x128xf32, #tpu.memory_space<vmem>>, vector<4x128xf32>,
    return
  }
  func.func @transform_0(%arg0: i32) -> (i32, i32) {
    %c0_i32 = arith.constant 0 : i32
    %c0_i32_0 = arith.constant 0 : i32
    return %arg0, %c0_i32 : i32, i32
  }
  func.func @transform_1(%arg0: i32) -> (i32, i32) {
    %c0_i32 = arith.constant 0 : i32
    %c0_i32_0 = arith.constant 0 : i32
    %c0_i32_1 = arith.constant 0 : i32
    return %c0_i32, %c0_i32_0 : i32, i32
  }
  func.func @transform_2(%arg0: i32) -> (i32, i32) {
    %c0_i32 = arith.constant 0 : i32
    %c0_i32_0 = arith.constant 0 : i32
    %c0_i32_1 = arith.constant 0 : i32
    return %c0_i32, %c0_i32_0 : i32, i32
  }
  func.func @transform_3(%arg0: i32) -> (i32, i32) {
    %c0_i32 = arith.constant 0 : i32
    %c0_i32_0 = arith.constant 0 : i32
    return %arg0, %c0_i32 : i32, i32
  }
}

</mosaic_0001>

<llo_original>
// kernel: net_forward.1
$region0: #{net_forward.1}
  #allocation0 [shape = 'u32[]', space=smem, size = 0x4, offset = 0x4, fixed_abs, tag = 'smem constant byte address 0x4 - core index']
  #allocation1 [shape = 'u32[144,128]{1,0:T(1,128)}', space=vmem, size = 0x12000, scoped, tag = 'internal scratch']
  %s0 = inlined_call_operand.vmem [shape: f32[4,512], index: 0, kind: input, shape index: {}]
  %s1 = inlined_call_operand.hbm [shape: bf16[512,128], index: 1, kind: input, shape index: {}]
  %s2 = inlined_call_operand.vmem [shape: f32[1,128], index: 2, kind: input, shape index: {}]
  %s3 = inlined_call_operand.hbm [shape: f32[4,128], index: 3, kind: output, shape index: {}]
  %s4 = sld [smem:[#allocation0]]
  $region26: #{net_forward.1} parent=0
    _
  %s6 = ssub.s32 1, %s4
  %s7 = scalar_select 0, %s6, %s4
  $region1: #{net_forward.1} parent=0
    #allocation2 [shape = 'u8[131072]{0}', space=vmem, size = 0x20000, scoped, tag = 'input window, operand 1, single buffered']
    #allocation3 [shape = 's32[1]{0}', space=sflag, size = 0x4, scoped, tag = 'scoped memory for net_forward.1']
    #allocation4 [shape = 's32[1]{0}', space=sflag, size = 0x4, scoped, tag = 'scoped memory for net_forward.1']
    #allocation5 [shape = 'u8[2048]{0}', space=vmem, size = 0x800, scoped, tag = 'output window, operand 0, single buffered']
    %8 = vsyncpa [#allocation3], 0
    %9 = vsyncpa [#allocation4], 0
    // Predicated region
    $region2: #{net_forward.1} parent=1 // pred_check
      _
    $region3: #{net_forward.1} parent=1 // pred_check_branch
      %11 = sbr.rel (0) target = $region5
    $region4: #{net_forward.1} parent=1 // pred_region
      _
    $region5: #{net_forward.1} parent=1 // pred_fallthru
      _
    // Predicated region
    $region6: #{net_forward.1} parent=1 // pred_check
      _
    $region7: #{net_forward.1} parent=1 // pred_check_branch
      %13 = sbr.rel (0) target = $region9
    $region8: #{net_forward.1} parent=1 // pred_region
      %s15 = ssub.s32 4096, 4096
      %16 = vsyncadd [#allocation3], %s15
      %s17 = sshll.u32 [#allocation2], 4
      %s18 = int_to_ptr.vmem [resolvable:$true] %s17
      %23 = dma.hbm_to_vmem [thread:$0]  %s1, 4096, %s18, [#allocation3], 64, 64, 4
    $region9: #{net_forward.1} parent=1 // pred_fallthru
      _
    // Predicated region
    $region10: #{net_forward.1} parent=1 // pred_check
      _
    $region11: #{net_forward.1} parent=1 // pred_check_branch
      %25 = sbr.rel (0) target = $region13
    $region12: #{net_forward.1} parent=1 // pred_region
      _
    $region13: #{net_forward.1} parent=1 // pred_fallthru
      _
    // Predicated region
    $region14: #{net_forward.1} parent=1 // pred_check
      _
    $region15: #{net_forward.1} parent=1 // pred_check_branch
      %27 = sbr.rel (0) target = $region17
    $region16: #{net_forward.1} parent=1 // pred_region
      %28 = dma.done [#allocation3], 4096
    $region17: #{net_forward.1} parent=1 // pred_fallthru
      _
    %v30 = vld [vmem:[%s0] sm:$0xff]
    %v31 = vld [vmem:[%s0 + $0x8] sm:$0xff]
    %v34 = vcombine.high %v30, %v30
    %v35 = vcombine.high %v31, %v31
    %v38 = vpack.c.bf16 %v30, %v30
    %v39 = vpack.c.bf16 %v34, %v34
    %v40 = vpack.c.bf16 %v31, %v31
    %v41 = vpack.c.bf16 %v35, %v35
    %v42 = vld [vmem:[#allocation2] sm:$0xf]
    %v43 = vld [vmem:[#allocation2 + $0x4] sm:$0xf]
    %v44 = vld [vmem:[#allocation2 + $0x8] sm:$0xf]
    %v45 = vld [vmem:[#allocation2 + $0xc] sm:$0xf]
    %v46 = vld [vmem:[#allocation2 + $0x10] sm:$0xf]
    %v47 = vld [vmem:[#allocation2 + $0x14] sm:$0xf]
    %v48 = vld [vmem:[#allocation2 + $0x18] sm:$0xf]
    %v49 = vld [vmem:[#allocation2 + $0x1c] sm:$0xf]
    %v50 = vld [vmem:[#allocation2 + $0x20] sm:$0xf]
    %v51 = vld [vmem:[#allocation2 + $0x24] sm:$0xf]
    %v52 = vld [vmem:[#allocation2 + $0x28] sm:$0xf]
    %v53 = vld [vmem:[#allocation2 + $0x2c] sm:$0xf]
    %v54 = vld [vmem:[#allocation2 + $0x30] sm:$0xf]
    %v55 = vld [vmem:[#allocation2 + $0x34] sm:$0xf]
    %v56 = vld [vmem:[#allocation2 + $0x38] sm:$0xf]
    %v57 = vld [vmem:[#allocation2 + $0x3c] sm:$0xf]
    %v58 = vld [vmem:[#allocation2 + $0x40] sm:$0xf]
    %v59 = vld [vmem:[#allocation2 + $0x44] sm:$0xf]
    %v60 = vld [vmem:[#allocation2 + $0x48] sm:$0xf]
    %v61 = vld [vmem:[#allocation2 + $0x4c] sm:$0xf]
    %v62 = vld [vmem:[#allocation2 + $0x50] sm:$0xf]
    %v63 = vld [vmem:[#allocation2 + $0x54] sm:$0xf]
    %v64 = vld [vmem:[#allocation2 + $0x58] sm:$0xf]
    %v65 = vld [vmem:[#allocation2 + $0x5c] sm:$0xf]
    %v66 = vld [vmem:[#allocation2 + $0x60] sm:$0xf]
    %v67 = vld [vmem:[#allocation2 + $0x64] sm:$0xf]
    %v68 = vld [vmem:[#allocation2 + $0x68] sm:$0xf]
    %v69 = vld [vmem:[#allocation2 + $0x6c] sm:$0xf]
    %v70 = vld [vmem:[#allocation2 + $0x70] sm:$0xf]
    %v71 = vld [vmem:[#allocation2 + $0x74] sm:$0xf]
    %v72 = vld [vmem:[#allocation2 + $0x78] sm:$0xf]
    %v73 = vld [vmem:[#allocation2 + $0x7c] sm:$0xf]
    %v74 = vld [vmem:[#allocation2 + $0x80] sm:$0xf]
    %v75 = vld [vmem:[#allocation2 + $0x84] sm:$0xf]
    %v76 = vld [vmem:[#allocation2 + $0x88] sm:$0xf]
    %v77 = vld [vmem:[#allocation2 + $0x8c] sm:$0xf]
    %v78 = vld [vmem:[#allocation2 + $0x90] sm:$0xf]
    %v79 = vld [vmem:[#allocation2 + $0x94] sm:$0xf]
    %v80 = vld [vmem:[#allocation2 + $0x98] sm:$0xf]
    %v81 = vld [vmem:[#allocation2 + $0x9c] sm:$0xf]
    %v82 = vld [vmem:[#allocation2 + $0xa0] sm:$0xf]
    %v83 = vld [vmem:[#allocation2 + $0xa4] sm:$0xf]
    %v84 = vld [vmem:[#allocation2 + $0xa8] sm:$0xf]
    %v85 = vld [vmem:[#allocation2 + $0xac] sm:$0xf]
    %v86 = vld [vmem:[#allocation2 + $0xb0] sm:$0xf]
    %v87 = vld [vmem:[#allocation2 + $0xb4] sm:$0xf]
    %v88 = vld [vmem:[#allocation2 + $0xb8] sm:$0xf]
    %v89 = vld [vmem:[#allocation2 + $0xbc] sm:$0xf]
    %v90 = vld [vmem:[#allocation2 + $0xc0] sm:$0xf]
    %v91 = vld [vmem:[#allocation2 + $0xc4] sm:$0xf]
    %v92 = vld [vmem:[#allocation2 + $0xc8] sm:$0xf]
    %v93 = vld [vmem:[#allocation2 + $0xcc] sm:$0xf]
    %v94 = vld [vmem:[#allocation2 + $0xd0] sm:$0xf]
    %v95 = vld [vmem:[#allocation2 + $0xd4] sm:$0xf]
    %v96 = vld [vmem:[#allocation2 + $0xd8] sm:$0xf]
    %v97 = vld [vmem:[#allocation2 + $0xdc] sm:$0xf]
    %v98 = vld [vmem:[#allocation2 + $0xe0] sm:$0xf]
    %v99 = vld [vmem:[#allocation2 + $0xe4] sm:$0xf]
    %v100 = vld [vmem:[#allocation2 + $0xe8] sm:$0xf]
    %v101 = vld [vmem:[#allocation2 + $0xec] sm:$0xf]
    %v102 = vld [vmem:[#allocation2 + $0xf0] sm:$0xf]
    %v103 = vld [vmem:[#allocation2 + $0xf4] sm:$0xf]
    %v104 = vld [vmem:[#allocation2 + $0xf8] sm:$0xf]
    %v105 = vld [vmem:[#allocation2 + $0xfc] sm:$0xf]
    %v106 = vld [vmem:[%s2] sm:$0x1]
    %v108 = vlaneseq
    %v109 = vshrl.u32 %v108, 7
    %v110 = vsub.s32 0, %v109
    %v111 = vrot.slane %v106, %v110
    %v177 = vunpack.c.l.b16 %v42
    %v178 = vunpack.c.l.b16 %v43
    %v179 = vunpack.c.l.b16 %v44
    %v180 = vunpack.c.l.b16 %v45
    %v181 = vunpack.c.l.b16 %v46
    %v182 = vunpack.c.l.b16 %v47
    %v183 = vunpack.c.l.b16 %v48
    %v184 = vunpack.c.l.b16 %v49
    %v185 = vunpack.c.l.b16 %v50
    %v186 = vunpack.c.l.b16 %v51
    %v187 = vunpack.c.l.b16 %v52
    %v188 = vunpack.c.l.b16 %v53
    %v189 = vunpack.c.l.b16 %v54
    %v190 = vunpack.c.l.b16 %v55
    %v191 = vunpack.c.l.b16 %v56
    %v192 = vunpack.c.l.b16 %v57
    %v193 = vunpack.c.l.b16 %v58
    %v194 = vunpack.c.l.b16 %v59
    %v195 = vunpack.c.l.b16 %v60
    %v196 = vunpack.c.l.b16 %v61
    %v197 = vunpack.c.l.b16 %v62
    %v198 = vunpack.c.l.b16 %v63
    %v199 = vunpack.c.l.b16 %v64
    %v200 = vunpack.c.l.b16 %v65
    %v201 = vunpack.c.l.b16 %v66
    %v202 = vunpack.c.l.b16 %v67
    %v203 = vunpack.c.l.b16 %v68
    %v204 = vunpack.c.l.b16 %v69
    %v205 = vunpack.c.l.b16 %v70
    %v206 = vunpack.c.l.b16 %v71
    %v207 = vunpack.c.l.b16 %v72
    %v208 = vunpack.c.l.b16 %v73
    %v209 = vunpack.c.l.b16 %v74
    %v210 = vunpack.c.l.b16 %v75
    %v211 = vunpack.c.l.b16 %v76
    %v212 = vunpack.c.l.b16 %v77
    %v213 = vunpack.c.l.b16 %v78
    %v214 = vunpack.c.l.b16 %v79
    %v215 = vunpack.c.l.b16 %v80
    %v216 = vunpack.c.l.b16 %v81
    %v217 = vunpack.c.l.b16 %v82
    %v218 = vunpack.c.l.b16 %v83
    %v219 = vunpack.c.l.b16 %v84
    %v220 = vunpack.c.l.b16 %v85
    %v221 = vunpack.c.l.b16 %v86
    %v222 = vunpack.c.l.b16 %v87
    %v223 = vunpack.c.l.b16 %v88
    %v224 = vunpack.c.l.b16 %v89
    %v225 = vunpack.c.l.b16 %v90
    %v226 = vunpack.c.l.b16 %v91
    %v227 = vunpack.c.l.b16 %v92
    %v228 = vunpack.c.l.b16 %v93
    %v229 = vunpack.c.l.b16 %v94
    %v230 = vunpack.c.l.b16 %v95
    %v231 = vunpack.c.l.b16 %v96
    %v232 = vunpack.c.l.b16 %v97
    %v233 = vunpack.c.l.b16 %v98
    %v234 = vunpack.c.l.b16 %v99
    %v235 = vunpack.c.l.b16 %v100
    %v236 = vunpack.c.l.b16 %v101
    %v237 = vunpack.c.l.b16 %v102
    %v238 = vunpack.c.l.b16 %v103
    %v239 = vunpack.c.l.b16 %v104
    %v240 = vunpack.c.l.b16 %v105
    %v241 = vpack.c.b16 %v178, %v177
    %v242 = vpack.c.b16 %v180, %v179
    %v243 = vpack.c.b16 %v182, %v181
    %v244 = vpack.c.b16 %v184, %v183
    %v245 = vpack.c.b16 %v186, %v185
    %v246 = vpack.c.b16 %v188, %v187
    %v247 = vpack.c.b16 %v190, %v189
    %v248 = vpack.c.b16 %v192, %v191
    %v249 = vpack.c.b16 %v194, %v193
    %v250 = vpack.c.b16 %v196, %v195
    %v251 = vpack.c.b16 %v198, %v197
    %v252 = vpack.c.b16 %v200, %v199
    %v253 = vpack.c.b16 %v202, %v201
    %v254 = vpack.c.b16 %v204, %v203
    %v255 = vpack.c.b16 %v206, %v205
    %v256 = vpack.c.b16 %v208, %v207
    %v257 = vpack.c.b16 %v210, %v209
    %v258 = vpack.c.b16 %v212, %v211
    %v259 = vpack.c.b16 %v214, %v213
    %v260 = vpack.c.b16 %v216, %v215
    %v261 = vpack.c.b16 %v218, %v217
    %v262 = vpack.c.b16 %v220, %v219
    %v263 = vpack.c.b16 %v222, %v221
    %v264 = vpack.c.b16 %v224, %v223
    %v265 = vpack.c.b16 %v226, %v225
    %v266 = vpack.c.b16 %v228, %v227
    %v267 = vpack.c.b16 %v230, %v229
    %v268 = vpack.c.b16 %v232, %v231
    %v269 = vpack.c.b16 %v234, %v233
    %v270 = vpack.c.b16 %v236, %v235
    %v271 = vpack.c.b16 %v238, %v237
    %v272 = vpack.c.b16 %v240, %v239
    %305 = vmatprep.subr.bf16.mxu0 0
    %306 = vmatpush1.bf16.msra.mxu0 %v241
    %307 = vmatprep.subr.bf16.mxu0 0
    %308 = vmatpush1.bf16.msra.mxu0 %v242
    %309 = vmatprep.subr.bf16.mxu0 0
    %310 = vmatpush1.bf16.msra.mxu0 %v243
    %311 = vmatprep.subr.bf16.mxu0 0
    %312 = vmatpush1.bf16.msra.mxu0 %v244
    %313 = vmatprep.subr.bf16.mxu0 0
    %314 = vmatpush1.bf16.msra.mxu0 %v245
    %315 = vmatprep.subr.bf16.mxu0 0
    %316 = vmatpush1.bf16.msra.mxu0 %v246
    %317 = vmatprep.subr.bf16.mxu0 0
    %318 = vmatpush1.bf16.msra.mxu0 %v247
    %319 = vmatprep.subr.bf16.mxu0 0
    %320 = vmatpush1.bf16.msra.mxu0 %v248
    %321 = vmatprep.subr.bf16.mxu0 0
    %322 = vmatpush1.bf16.msra.mxu0 %v249
    %323 = vmatprep.subr.bf16.mxu0 0
    %324 = vmatpush1.bf16.msra.mxu0 %v250
    %325 = vmatprep.subr.bf16.mxu0 0
    %326 = vmatpush1.bf16.msra.mxu0 %v251
    %327 = vmatprep.subr.bf16.mxu0 0
    %328 = vmatpush1.bf16.msra.mxu0 %v252
    %329 = vmatprep.subr.bf16.mxu0 0
    %330 = vmatpush1.bf16.msra.mxu0 %v253
    %331 = vmatprep.subr.bf16.mxu0 0
    %332 = vmatpush1.bf16.msra.mxu0 %v254
    %333 = vmatprep.subr.bf16.mxu0 0
    %334 = vmatpush1.bf16.msra.mxu0 %v255
    %335 = vmatprep.subr.bf16.mxu0 0
    %336 = vmatpush1.bf16.msra.mxu0 %v256
    %337 = vmatprep.mubr.bf16.mxu0 %v39
    %338 = vmatmul.mubr.bf16.gmra.mrb[0].mxu0 %v38
    %v339 = vpop.f32.mrb[0].mxu0
    %v340 = vadd.f32 %v111, %v339
    %v341 = vpop.f32.mrb[0].mxu0
    %v342 = vpop.f32.mrb[0].mxu0
    %v343 = vpop.f32.mrb[0].mxu0
    %344 = vdwg.mxu0
    %345 = vmatprep.subr.bf16.mxu0 0
    %346 = vmatpush1.bf16.msra.mxu0 %v257
    %347 = vmatprep.subr.bf16.mxu0 0
    %348 = vmatpush1.bf16.msra.mxu0 %v258
    %349 = vmatprep.subr.bf16.mxu0 0
    %350 = vmatpush1.bf16.msra.mxu0 %v259
    %351 = vmatprep.subr.bf16.mxu0 0
    %352 = vmatpush1.bf16.msra.mxu0 %v260
    %353 = vmatprep.subr.bf16.mxu0 0
    %354 = vmatpush1.bf16.msra.mxu0 %v261
    %355 = vmatprep.subr.bf16.mxu0 0
    %356 = vmatpush1.bf16.msra.mxu0 %v262
    %357 = vmatprep.subr.bf16.mxu0 0
    %358 = vmatpush1.bf16.msra.mxu0 %v263
    %359 = vmatprep.subr.bf16.mxu0 0
    %360 = vmatpush1.bf16.msra.mxu0 %v264
    %361 = vmatprep.subr.bf16.mxu0 0
    %362 = vmatpush1.bf16.msra.mxu0 %v265
    %363 = vmatprep.subr.bf16.mxu0 0
    %364 = vmatpush1.bf16.msra.mxu0 %v266
    %365 = vmatprep.subr.bf16.mxu0 0
    %366 = vmatpush1.bf16.msra.mxu0 %v267
    %367 = vmatprep.subr.bf16.mxu0 0
    %368 = vmatpush1.bf16.msra.mxu0 %v268
    %369 = vmatprep.subr.bf16.mxu0 0
    %370 = vmatpush1.bf16.msra.mxu0 %v269
    %371 = vmatprep.subr.bf16.mxu0 0
    %372 = vmatpush1.bf16.msra.mxu0 %v270
    %373 = vmatprep.subr.bf16.mxu0 0
    %374 = vmatpush1.bf16.msra.mxu0 %v271
    %375 = vmatprep.subr.bf16.mxu0 0
    %376 = vmatpush1.bf16.msra.mxu0 %v272
    %377 = vmatprep.mubr.bf16.mxu0 %v41
    %378 = vmatmul.mubr.bf16.gmra.mrb[0].mxu0 %v40
    %v379 = vpop.f32.mrb[0].mxu0
    %v380 = vadd.f32 %v340, %v379
    %v381 = vpop.f32.mrb[0].mxu0
    %v382 = vpop.f32.mrb[0].mxu0
    %v383 = vpop.f32.mrb[0].mxu0
    %384 = vdwg.mxu0
    %385 = vst [vmem:[#allocation5] sm:$0xf] %v380
    // Predicated region
    $region18: #{net_forward.1} parent=1 // pred_check
      _
    $region19: #{net_forward.1} parent=1 // pred_check_branch
      %387 = sbr.rel (0) target = $region21
    $region20: #{net_forward.1} parent=1 // pred_region
      %s389 = ssub.s32 64, 64
      %390 = vsyncadd [#allocation4], %s389
      %s392 = sshll.u32 [#allocation5], 4
      %s393 = int_to_ptr.vmem [resolvable:$true] %s392
      %395 = dma.vmem_to_hbm [thread:$0]  %s393, 64, %s3, [#allocation4]
    $region21: #{net_forward.1} parent=1 // pred_fallthru
      _
    // Predicated region
    $region22: #{net_forward.1} parent=1 // pred_check
      _
    $region23: #{net_forward.1} parent=1 // pred_check_branch
      %397 = sbr.rel (0) target = $region25
    $region24: #{net_forward.1} parent=1 // pred_region
      %398 = dma.done [#allocation4], 64
    $region25: #{net_forward.1} parent=1 // pred_fallthru
      _
    %399 = vsyncpa [#allocation3], 1
    %400 = vsyncpa [#allocation4], 1

</llo_original>
